<compile_context>
chip_gen: v6e
topology: v6e:2x2x1
jax: 0.10.0
libtpu: 0.0.40
codegen_flags: <defaults>
</compile_context>

<pallas_src>
import functools

import jax
import jax.numpy as jnp
from jax.experimental import pallas as pl
from jax.experimental.pallas import tpu as pltpu

# ---- ppo_settings (synthetic, deterministic) --------------------------------
GAMMA = 0.99
EPISODE_CLIP = 0.2
LEARNING_RATE = 1e-3
STEP_SIZE = 1

IN_FEATURES1 = 256     # small stand-in for the 6000-dim flattened image
OUT_FEATURES1 = 128
IN_FEATURES2 = 128
OUT_FEATURES2 = 2      # two discrete actions

PAD_OUT = 128          # lane-padded width of the policy head (acting branch)
TILE_B = 128           # batch tile: full MXU M-edge, multiple of 8 sublanes


# ---- training kernel: MLP + exact 2-class softmax select + clipped surrogate
def make_train_kernel(inv_b):
    def kernel(state_ref, w1_ref, b1_ref, wdiff_ref, bdiff_ref,
               action_ref, ap_ref, adv_ref, loss_ref, acc_ref):
        i = pl.program_id(0)

        @pl.when(i == 0)
        def _():
            acc_ref[...] = jnp.zeros_like(acc_ref)

        # hidden = relu(state @ W1 + b1)        bf16 MXU -> f32 acc, f32 VPU
        h = jnp.dot(state_ref[...], w1_ref[...],
                    preferred_element_type=jnp.float32) + b1_ref[...]
        h = jnp.maximum(h, 0.0)

        # 2-class head: d = logit1 - logit0 = h . (W2[:,1]-W2[:,0]) + (b2[1]-b2[0])
        d = jnp.sum(h * wdiff_ref[...], axis=-1, keepdims=True) + bdiff_ref[0, 0]

        # p(action) = softmax(logits)[action] == sigmoid((2a-1) * d)  (exact)
        sign = (2 * action_ref[...] - 1).astype(jnp.float32)
        p_sel = 1.0 / (1.0 + jnp.exp(-(sign * d)))

        r = p_sel / ap_ref[...]
        adv = adv_ref[...]
        loss1 = r * adv
        loss2 = jnp.clip(r, 1.0 - EPISODE_CLIP, 1.0 + EPISODE_CLIP) * adv
        neg = -jnp.minimum(loss1, loss2)                       # (TILE_B, 1)

        # accumulate tile sum across the batch grid (padded rows have adv=0)
        acc_ref[...] += jnp.sum(neg, axis=0, keepdims=True)    # (1, 1)

        @pl.when(i == pl.num_programs(0) - 1)
        def _():
            # lane-dense scalar emit (mean over the *true* batch size)
            loss_ref[...] = jnp.broadcast_to(acc_ref[...], (1, 128)) * inv_b

    return kernel


# ---- acting kernel: logits only --------------------------------------------
def act_kernel(state_ref, w1_ref, b1_ref, w2_ref, b2_ref, logits_ref):
    h = jnp.dot(state_ref[...], w1_ref[...],
                preferred_element_type=jnp.float32) + b1_ref[...]
    h = jnp.maximum(h, 0.0)
    logits_ref[...] = jnp.dot(h.astype(jnp.bfloat16), w2_ref[...],
                              preferred_element_type=jnp.float32) + b2_ref[...]


# ---- helpers -----------------------------------------------------------------
def _round_up(n, m):
    return ((n + m - 1) // m) * m


def _pad_rows(x, target_rows, value):
    pad = target_rows - x.shape[0]
    if pad == 0:
        return x
    filler = jnp.full((pad,) + x.shape[1:], value, x.dtype)
    return jnp.concatenate([x, filler], axis=0)


_COMPILER_PARAMS = dict(vmem_limit_bytes=32 * 1024 * 1024)


# ---- pallas_call wrappers ----------------------------------------------------
def _train_loss(params, state, action, action_probability, advantage):
    B = state.shape[0]
    pb = _round_up(B, TILE_B)

    state_b = _pad_rows(state.astype(jnp.bfloat16), pb, 0)
    act_p = _pad_rows(jnp.asarray(action, jnp.int32).reshape(B, 1), pb, 0)
    ap_p = _pad_rows(jnp.asarray(action_probability, jnp.float32).reshape(B, 1), pb, 1.0)
    adv_p = _pad_rows(jnp.asarray(advantage, jnp.float32).reshape(B, 1), pb, 0.0)

    out = pl.pallas_call(
        make_train_kernel(1.0 / B),
        out_shape=jax.ShapeDtypeStruct((1, 128), jnp.float32),
        grid_spec=pltpu.PrefetchScalarGridSpec(
            num_scalar_prefetch=0,
            grid=(pb // TILE_B,),
            in_specs=[
                pl.BlockSpec((TILE_B, IN_FEATURES1), lambda i: (i, 0)),   # state tile
                pl.BlockSpec((IN_FEATURES1, OUT_FEATURES1), lambda i: (0, 0)),  # W1 resident
                pl.BlockSpec((1, OUT_FEATURES1), lambda i: (0, 0)),       # b1 resident
                pl.BlockSpec((1, IN_FEATURES2), lambda i: (0, 0)),        # W2 diff resident
                pl.BlockSpec(memory_space=pltpu.MemorySpace.SMEM),        # b2 diff scalar
                pl.BlockSpec((TILE_B, 1), lambda i: (i, 0)),              # action
                pl.BlockSpec((TILE_B, 1), lambda i: (i, 0)),              # action prob
                pl.BlockSpec((TILE_B, 1), lambda i: (i, 0)),              # advantage
            ],
            out_specs=pl.BlockSpec((1, 128), lambda i: (0, 0)),
            scratch_shapes=[pltpu.VMEM((1, 1), jnp.float32)],
        ),
        compiler_params=pltpu.CompilerParams(
            dimension_semantics=("arbitrary",), **_COMPILER_PARAMS),
    )(state_b, params["w1"], params["b1"], params["w2_diff"], params["b2_diff"],
      act_p, ap_p, adv_p)
    return out[0, 0]


def _act_logits(params, state):
    B = state.shape[0]
    pb = _round_up(B, TILE_B)
    state_b = _pad_rows(state.astype(jnp.bfloat16), pb, 0)

    logits_pad = pl.pallas_call(
        act_kernel,
        out_shape=jax.ShapeDtypeStruct((pb, PAD_OUT), jnp.float32),
        grid_spec=pltpu.PrefetchScalarGridSpec(
            num_scalar_prefetch=0,
            grid=(pb // TILE_B,),
            in_specs=[
                pl.BlockSpec((TILE_B, IN_FEATURES1), lambda i: (i, 0)),
                pl.BlockSpec((IN_FEATURES1, OUT_FEATURES1), lambda i: (0, 0)),
                pl.BlockSpec((1, OUT_FEATURES1), lambda i: (0, 0)),
                pl.BlockSpec((IN_FEATURES2, PAD_OUT), lambda i: (0, 0)),
                pl.BlockSpec((1, PAD_OUT), lambda i: (0, 0)),
            ],
            out_specs=pl.BlockSpec((TILE_B, PAD_OUT), lambda i: (i, 0)),
        ),
        compiler_params=pltpu.CompilerParams(
            dimension_semantics=("parallel",), **_COMPILER_PARAMS),
    )(state_b, params["w1"], params["b1"], params["w2_pad"], params["b2_pad"])
    return logits_pad[:B, :OUT_FEATURES2]


# ---- parameter init (PyTorch nn.Linear default: U(-1/sqrt(fan_in), +)) -------
def init_params(key):
    k1, k2, k3, k4 = jax.random.split(key, 4)
    lim1 = 1.0 / jnp.sqrt(IN_FEATURES1)
    lim2 = 1.0 / jnp.sqrt(IN_FEATURES2)
    w1 = jax.random.uniform(k1, (IN_FEATURES1, OUT_FEATURES1), jnp.float32, -lim1, lim1)
    b1 = jax.random.uniform(k2, (1, OUT_FEATURES1), jnp.float32, -lim1, lim1)
    w2 = jax.random.uniform(k3, (IN_FEATURES2, OUT_FEATURES2), jnp.float32, -lim2, lim2)
    b2 = jax.random.uniform(k4, (1, OUT_FEATURES2), jnp.float32, -lim2, lim2)

    # acting head: lane-padded to 128 (wrapper slices [:, :2], pad value unused)
    w2_pad = jnp.zeros((IN_FEATURES2, PAD_OUT), jnp.float32).at[:, :OUT_FEATURES2].set(w2)
    b2_pad = jnp.zeros((1, PAD_OUT), jnp.float32).at[:, :OUT_FEATURES2].set(b2)

    # training head: 2-class softmax collapses to a single logit difference
    w2_diff = (w2[:, 1] - w2[:, 0]).reshape(1, IN_FEATURES2)
    b2_diff = (b2[:, 1] - b2[:, 0]).reshape(1, 1)

    return dict(
        w1=w1.astype(jnp.bfloat16), b1=b1,
        w2=w2, b2=b2,                                   # f32 master copy (reference)
        w2_pad=w2_pad.astype(jnp.bfloat16), b2_pad=b2_pad,
        w2_diff=w2_diff, b2_diff=b2_diff,
    )


# ---- Python wrapper reproducing PpoAgent.forward -----------------------------
def ppo_forward(params, state, action=None, action_probability=None,
                advantage=None, deterministic=None, rng_key=None):
    if action is None:
        # acting branch: logits only
        logits = _act_logits(params, state)                     # (B, 2) f32
        if deterministic:
            a = int(jnp.argmax(logits[0]))
            return a, 1.0
        a = int(jax.random.categorical(rng_key, logits[0]))
        p = float(jax.nn.softmax(logits[0])[a])
        return a, p

    # training branch: PPO clipped surrogate loss (mean fused in-kernel)
    return _train_loss(params, state, action, action_probability, advantage)


# ---- pure-JAX reference (matches the kernel's bf16 matmul operands) -----------
def ppo_forward_ref(params, state, action, action_probability, advantage):
    hi = jax.lax.Precision.HIGHEST
    s = state.astype(jnp.bfloat16).astype(jnp.float32)
    w1 = params["w1"].astype(jnp.float32)
    h = jnp.maximum(jnp.dot(s, w1, precision=hi) + params["b1"], 0.0)
    logits = jnp.dot(h, params["w2"], precision=hi) + params["b2"]
    probs = jax.nn.softmax(logits, axis=1)
    ts = jnp.eye(OUT_FEATURES2, dtype=jnp.float32)[action]
    r = jnp.sum(probs * ts, axis=1) / action_probability
    loss1 = r * advantage
    loss2 = jnp.clip(r, 1.0 - EPISODE_CLIP, 1.0 + EPISODE_CLIP) * advantage
    return jnp.mean(-jnp.minimum(loss1, loss2))


if __name__ == "__main__":
    key = jax.random.PRNGKey(0)
    kp, ks, ka, kap, kadv, ksamp, ks2, ka2, kap2, kadv2 = jax.random.split(key, 10)

    params = init_params(kp)

    # --- training branch, single tile (B=8 -> padded to 128, grid=1) ---------
    B = 8
    state = jax.random.normal(ks, (B, IN_FEATURES1), jnp.float32)
    action = jax.random.randint(ka, (B,), 0, OUT_FEATURES2)
    action_probability = jax.random.uniform(kap, (B,), jnp.float32, 0.1, 0.9)
    advantage = jax.random.normal(kadv, (B,), jnp.float32)

    loss = ppo_forward(params, state, action=action,
                       action_probability=action_probability,
                       advantage=advantage)
    loss = jax.block_until_ready(loss)
    ref = ppo_forward_ref(params, state, action, action_probability, advantage)
    assert jnp.allclose(loss, ref, rtol=1e-4, atol=1e-5), (loss, ref)

    # --- training branch, multi-tile grid (B=300 -> padded to 384, grid=3) ---
    B2 = 300
    state2 = jax.random.normal(ks2, (B2, IN_FEATURES1), jnp.float32)
    action2 = jax.random.randint(ka2, (B2,), 0, OUT_FEATURES2)
    ap2 = jax.random.uniform(kap2, (B2,), jnp.float32, 0.1, 0.9)
    adv2 = jax.random.normal(kadv2, (B2,), jnp.float32)
    loss2 = jax.block_until_ready(
        ppo_forward(params, state2, action=action2,
                    action_probability=ap2, advantage=adv2))
    ref2 = ppo_forward_ref(params, state2, action2, ap2, adv2)
    assert jnp.allclose(loss2, ref2, rtol=1e-4, atol=1e-5), (loss2, ref2)

    # --- acting branch ---------------------------------------------------------
    act_d, prob_d = ppo_forward(params, state[:1], deterministic=True)
    act_s, prob_s = ppo_forward(params, state[:1], deterministic=False,
                                rng_key=ksamp)
    assert 0 <= act_d < OUT_FEATURES2 and prob_d == 1.0
    assert 0 <= act_s < OUT_FEATURES2 and 0.0 <= prob_s <= 1.0

    print("KERNEL_OK")
</pallas_src>

<mosaic_0001>
module attributes {stable_mosaic.version = 11 : i64} {
  func.func @kernel(%arg0: i32, %arg1: memref<128x256xbf16, #tpu.memory_space<vmem>>, %arg2: memref<256x128xbf16, #tpu.memory_space<vmem>>, %arg3: memref<1x128xf32, #tpu.memory_space<vmem>>, %arg4: memref<1x128xf32, #tpu.memory_space<vmem>>, %arg5: memref<1x1xf32, #tpu.memory_space<smem>>, %arg6: memref<128x1xi32, #tpu.memory_space<vmem>>, %arg7: memref<128x1xf32, #tpu.memory_space<vmem>>, %arg8: memref<128x1xf32, #tpu.memory_space<vmem>>, %arg9: memref<1x128xf32, #tpu.memory_space<vmem>>, %arg10: memref<1x1xf32, #tpu.memory_space<vmem>>) attributes {dimension_semantics = [#tpu.dimension_semantics<arbitrary>], iteration_bounds = array<i64: 1>, scalar_prefetch = 0 : i64, scratch_operands = 1 : i64, tpu.core_type = #tpu.core_type<tc>, window_params = [{transform_indices = @transform_0, window_bounds = array<i64: 128, 256>}, {pipeline_mode = #tpu.pipeline_mode<synchronous>, transform_indices = @transform_1, window_bounds = array<i64: 256, 128>}, {pipeline_mode = #tpu.pipeline_mode<synchronous>, transform_indices = @transform_2, window_bounds = array<i64: 1, 128>}, {pipeline_mode = #tpu.pipeline_mode<synchronous>, transform_indices = @transform_3, window_bounds = array<i64: 1, 128>}, {transform_indices = @transform_4, window_bounds = array<i64: 1, 1>}, {transform_indices = @transform_5, window_bounds = array<i64: 128, 1>}, {transform_indices = @transform_6, window_bounds = array<i64: 128, 1>}, {transform_indices = @transform_7, window_bounds = array<i64: 128, 1>}, {pipeline_mode = #tpu.pipeline_mode<synchronous>, transform_indices = @transform_8, window_bounds = array<i64: 1, 128>}]} {
    %c0_i32 = arith.constant 0 : i32
    %0 = arith.cmpi eq, %arg0, %c0_i32 : i32
    %1 = arith.extui %0 : i1 to i32
    %c0_i32_0 = arith.constant 0 : i32
    %2 = arith.cmpi ne, %1, %c0_i32_0 : i32
    scf.if %2 {
      %cst_31 = arith.constant 0.000000e+00 : f32
      %53 = vector.broadcast %cst_31 : f32 to vector<1x1xf32>
      %c0_32 = arith.constant 0 : index
      %c0_33 = arith.constant 0 : index
      %54 = vector.load %arg10[%c0_32, %c0_33] : memref<1x1xf32, #tpu.memory_space<vmem>>, vector<1x1xf32>
      tpu.vector_store %arg10[%c0_32, %c0_33], %53 {strides = array<i32>} : memref<1x1xf32, #tpu.memory_space<vmem>>, vector<1x1xf32>,
    } else {
    }
    %c0 = arith.constant 0 : index
    %c0_1 = arith.constant 0 : index
    %3 = vector.load %arg1[%c0, %c0_1] : memref<128x256xbf16, #tpu.memory_space<vmem>>, vector<128x256xbf16>
    %c0_2 = arith.constant 0 : index
    %c0_3 = arith.constant 0 : index
    %4 = vector.load %arg2[%c0_2, %c0_3] : memref<256x128xbf16, #tpu.memory_space<vmem>>, vector<256x128xbf16>
    %cst = arith.constant dense<0.000000e+00> : vector<128x128xf32>
    %5 = tpu.matmul %3, %4, %cst {dimension_numbers = #tpu.dot_dimension_numbers<[1], [0], [0], [1], [0, 0, 1, 1], [], []>} : vector<128x256xbf16>, vector<256x128xbf16>, vector<128x128xf32> -> vector<128x128xf32>
    %c0_4 = arith.constant 0 : index
    %c0_5 = arith.constant 0 : index
    %6 = vector.load %arg3[%c0_4, %c0_5] : memref<1x128xf32, #tpu.memory_space<vmem>>, vector<1x128xf32>
    %7 = vector.broadcast %6 : vector<1x128xf32> to vector<128x128xf32>
    %8 = arith.addf %5, %7 : vector<128x128xf32>
    %cst_6 = arith.constant 0.000000e+00 : f32
    %9 = vector.broadcast %cst_6 : f32 to vector<128x128xf32>
    %10 = arith.maximumf %8, %9 : vector<128x128xf32>
    %c0_7 = arith.constant 0 : index
    %c0_8 = arith.constant 0 : index
    %11 = vector.load %arg4[%c0_7, %c0_8] : memref<1x128xf32, #tpu.memory_space<vmem>>, vector<1x128xf32>
    %12 = vector.broadcast %11 : vector<1x128xf32> to vector<128x128xf32>
    %13 = arith.mulf %10, %12 : vector<128x128xf32>
    %cst_9 = arith.constant dense<0.000000e+00> : vector<128xf32>
    %14 = vector.multi_reduction <add>, %13, %cst_9 [1] : vector<128x128xf32> to vector<128xf32>
    %15 = vector.shape_cast %14 : vector<128xf32> to vector<128x1xf32>
    %c0_10 = arith.constant 0 : index
    %c0_11 = arith.constant 0 : index
    %16 = memref.load %arg5[%c0_10, %c0_11] : memref<1x1xf32, #tpu.memory_space<smem>>
    %17 = vector.broadcast %16 : f32 to vector<128x1xf32>
    %18 = arith.addf %15, %17 : vector<128x1xf32>
    %c0_12 = arith.constant 0 : index
    %c0_13 = arith.constant 0 : index
    %19 = vector.load %arg6[%c0_12, %c0_13] : memref<128x1xi32, #tpu.memory_space<vmem>>, vector<128x1xi32>
    %c2_i32 = arith.constant 2 : i32
    %20 = vector.broadcast %c2_i32 : i32 to vector<128x1xi32>
    %21 = arith.muli %20, %19 : vector<128x1xi32>
    %c1_i32 = arith.constant 1 : i32
    %22 = vector.broadcast %c1_i32 : i32 to vector<128x1xi32>
    %23 = arith.subi %21, %22 : vector<128x1xi32>
    %24 = arith.sitofp %23 : vector<128x1xi32> to vector<128x1xf32>
    %25 = arith.mulf %24, %18 : vector<128x1xf32>
    %cst_14 = arith.constant 0.000000e+00 : f32
    %26 = vector.broadcast %cst_14 : f32 to vector<128x1xf32>
    %27 = arith.subf %26, %25 : vector<128x1xf32>
    %28 = math.exp %27 : vector<128x1xf32>
    %cst_15 = arith.constant 1.000000e+00 : f32
    %29 = vector.broadcast %cst_15 : f32 to vector<128x1xf32>
    %30 = arith.addf %29, %28 : vector<128x1xf32>
    %cst_16 = arith.constant 1.000000e+00 : f32
    %31 = vector.broadcast %cst_16 : f32 to vector<128x1xf32>
    %32 = arith.divf %31, %30 : vector<128x1xf32>
    %c0_17 = arith.constant 0 : index
    %c0_18 = arith.constant 0 : index
    %33 = vector.load %arg7[%c0_17, %c0_18] : memref<128x1xf32, #tpu.memory_space<vmem>>, vector<128x1xf32>
    %34 = arith.divf %32, %33 : vector<128x1xf32>
    %c0_19 = arith.constant 0 : index
    %c0_20 = arith.constant 0 : index
    %35 = vector.load %arg8[%c0_19, %c0_20] : memref<128x1xf32, #tpu.memory_space<vmem>>, vector<128x1xf32>
    %36 = arith.mulf %34, %35 : vector<128x1xf32>
    %cst_21 = arith.constant 8.000000e-01 : f32
    %cst_22 = arith.constant 1.200000e+00 : f32
    %37 = vector.broadcast %cst_21 : f32 to vector<128x1xf32>
    %38 = arith.maximumf %37, %34 : vector<128x1xf32>
    %39 = vector.broadcast %cst_22 : f32 to vector<128x1xf32>
    %40 = arith.minimumf %39, %38 : vector<128x1xf32>
    %41 = arith.mulf %40, %35 : vector<128x1xf32>
    %42 = arith.minimumf %36, %41 : vector<128x1xf32>
    %cst_23 = arith.constant 0.000000e+00 : f32
    %43 = vector.broadcast %cst_23 : f32 to vector<128x1xf32>
    %44 = arith.subf %43, %42 : vector<128x1xf32>
    %c0_24 = arith.constant 0 : index
    %c0_25 = arith.constant 0 : index
    %45 = vector.load %arg10[%c0_24, %c0_25] : memref<1x1xf32, #tpu.memory_space<vmem>>, vector<1x1xf32>
    %cst_26 = arith.constant dense<0.000000e+00> : vector<1xf32>
    %46 = vector.multi_reduction <add>, %44, %cst_26 [0] : vector<128x1xf32> to vector<1xf32>
    %47 = vector.shape_cast %46 : vector<1xf32> to vector<1x1xf32>
    %48 = arith.addf %45, %47 : vector<1x1xf32>
    %c0_27 = arith.constant 0 : index
    %c0_28 = arith.constant 0 : index
    %49 = vector.load %arg10[%c0_27, %c0_28] : memref<1x1xf32, #tpu.memory_space<vmem>>, vector<1x1xf32>
    tpu.vector_store %arg10[%c0_27, %c0_28], %48 {strides = array<i32>} : memref<1x1xf32, #tpu.memory_space<vmem>>, vector<1x1xf32>,
    %c0_i32_29 = arith.constant 0 : i32
    %50 = arith.cmpi eq, %arg0, %c0_i32_29 : i32
    %51 = arith.extui %50 : i1 to i32
    %c0_i32_30 = arith.constant 0 : i32
    %52 = arith.cmpi ne, %51, %c0_i32_30 : i32
    scf.if %52 {
      %c0_31 = arith.constant 0 : index
      %c0_32 = arith.constant 0 : index
      %53 = vector.load %arg10[%c0_31, %c0_32] : memref<1x1xf32, #tpu.memory_space<vmem>>, vector<1x1xf32>
      %54 = vector.shape_cast %53 : vector<1x1xf32> to vector<1x1xf32>
      %55 = vector.broadcast %54 : vector<1x1xf32> to vector<1x128xf32>
      %cst_33 = arith.constant 1.250000e-01 : f32
      %56 = vector.broadcast %cst_33 : f32 to vector<1x128xf32>
      %57 = arith.mulf %55, %56 : vector<1x128xf32>
      %c0_34 = arith.constant 0 : index
      %c0_35 = arith.constant 0 : index
      %58 = vector.load %arg9[%c0_34, %c0_35] : memref<1x128xf32, #tpu.memory_space<vmem>>, vector<1x128xf32>
      tpu.vector_store %arg9[%c0_34, %c0_35], %57 {strides = array<i32>} : memref<1x128xf32, #tpu.memory_space<vmem>>, vector<1x128xf32>,
    } else {
    }
    return
  }
  func.func @transform_0(%arg0: i32) -> (i32, i32) {
    %c0_i32 = arith.constant 0 : i32
    %c0_i32_0 = arith.constant 0 : i32
    return %arg0, %c0_i32 : i32, i32
  }
  func.func @transform_1(%arg0: i32) -> (i32, i32) {
    %c0_i32 = arith.constant 0 : i32
    %c0_i32_0 = arith.constant 0 : i32
    %c0_i32_1 = arith.constant 0 : i32
    return %c0_i32, %c0_i32_0 : i32, i32
  }
  func.func @transform_2(%arg0: i32) -> (i32, i32) {
    %c0_i32 = arith.constant 0 : i32
    %c0_i32_0 = arith.constant 0 : i32
    %c0_i32_1 = arith.constant 0 : i32
    return %c0_i32, %c0_i32_0 : i32, i32
  }
  func.func @transform_3(%arg0: i32) -> (i32, i32) {
    %c0_i32 = arith.constant 0 : i32
    %c0_i32_0 = arith.constant 0 : i32
    %c0_i32_1 = arith.constant 0 : i32
    return %c0_i32, %c0_i32_0 : i32, i32
  }
  func.func @transform_4(%arg0: i32) -> (i32, i32) {
    %c0_i32 = arith.constant 0 : i32
    %c0_i32_0 = arith.constant 0 : i32
    %c0_i32_1 = arith.constant 0 : i32
    return %c0_i32, %c0_i32_0 : i32, i32
  }
  func.func @transform_5(%arg0: i32) -> (i32, i32) {
    %c0_i32 = arith.constant 0 : i32
    %c0_i32_0 = arith.constant 0 : i32
    return %arg0, %c0_i32 : i32, i32
  }
  func.func @transform_6(%arg0: i32) -> (i32, i32) {
    %c0_i32 = arith.constant 0 : i32
    %c0_i32_0 = arith.constant 0 : i32
    return %arg0, %c0_i32 : i32, i32
  }
  func.func @transform_7(%arg0: i32) -> (i32, i32) {
    %c0_i32 = arith.constant 0 : i32
    %c0_i32_0 = arith.constant 0 : i32
    return %arg0, %c0_i32 : i32, i32
  }
  func.func @transform_8(%arg0: i32) -> (i32, i32) {
    %c0_i32 = arith.constant 0 : i32
    %c0_i32_0 = arith.constant 0 : i32
    %c0_i32_1 = arith.constant 0 : i32
    return %c0_i32, %c0_i32_0 : i32, i32
  }
}

</mosaic_0001>

<llo_original>
// kernel: tpu_custom_call.1
$region0: #{tpu_custom_call.1}
  #allocation0 [shape = 'u32[]', space=smem, size = 0x4, offset = 0x4, fixed_abs, tag = 'smem constant byte address 0x4 - core index']
  #allocation1 [shape = 'u32[144,128]{1,0:T(1,128)}', space=vmem, size = 0x12000, scoped, tag = 'internal scratch']
  #allocation2 [shape = 'f32[1,1]{1,0:T(1,128)}', space=vmem, size = 0x200, scoped, tag = 'scratch operand']
  #allocation3 [shape = 'f32[1,1]{1,0:T(1,128)S(6)}', space=smem, size = 0x200, scoped, tag = 'scoped memory for tpu_custom_call.1']
  %s0 = inlined_call_operand.vmem [shape: bf16[128,256], index: 0, kind: input, shape index: {}]
  %s1 = inlined_call_operand.vmem [shape: bf16[256,128], index: 1, kind: input, shape index: {}]
  %s2 = inlined_call_operand.vmem [shape: f32[1,128], index: 2, kind: input, shape index: {}]
  %s3 = inlined_call_operand.vmem [shape: f32[1,128], index: 3, kind: input, shape index: {}]
  %s4 = inlined_call_operand.<no memory space> [shape: f32[1,1], index: 4, kind: input, shape index: {}]
  %s5 = inlined_call_operand.vmem [shape: s32[128,1], index: 5, kind: input, shape index: {}]
  %s6 = inlined_call_operand.vmem [shape: f32[128,1], index: 6, kind: input, shape index: {}]
  %s7 = inlined_call_operand.vmem [shape: f32[128,1], index: 7, kind: input, shape index: {}]
  %s8 = inlined_call_operand.hbm [shape: f32[1,128], index: 8, kind: output, shape index: {}]
  %s9 = sld [smem:[#allocation0]]
  $region50: #{tpu_custom_call.1} parent=0
    _
  %s11 = ssub.s32 1, %s9
  %s12 = scalar_select 0, %s11, %s9
  %13 = sst [smem:[#allocation3]] %s4
  $region1: #{tpu_custom_call.1} parent=0
    #allocation4 [shape = 'u8[512]{0}', space=vmem, size = 0x400, scoped, tag = 'output window, operand 0, single buffered']
    #allocation5 [shape = 's32[1]{0}', space=sflag, size = 0x4, scoped, tag = 'scoped memory for tpu_custom_call.1']
    %14 = vsyncpa [#allocation5], 0
    // Predicated region
    $region2: #{tpu_custom_call.1} parent=1 // pred_check
      _
    $region3: #{tpu_custom_call.1} parent=1 // pred_check_branch
      %16 = sbr.rel (0) target = $region5
    $region4: #{tpu_custom_call.1} parent=1 // pred_region
      _
    $region5: #{tpu_custom_call.1} parent=1 // pred_fallthru
      _
    // Predicated region
    $region6: #{tpu_custom_call.1} parent=1 // pred_check
      _
    $region7: #{tpu_custom_call.1} parent=1 // pred_check_branch
      %18 = sbr.rel (0) target = $region9
    $region8: #{tpu_custom_call.1} parent=1 // pred_region
      _
    $region9: #{tpu_custom_call.1} parent=1 // pred_fallthru
      _
    // Predicated region
    $region10: #{tpu_custom_call.1} parent=1 // pred_check
      _
    $region11: #{tpu_custom_call.1} parent=1 // pred_check_branch
      %20 = sbr.rel (0) target = $region13
    $region12: #{tpu_custom_call.1} parent=1 // pred_region
      _
    $region13: #{tpu_custom_call.1} parent=1 // pred_fallthru
      _
    // Predicated region
    $region14: #{tpu_custom_call.1} parent=1 // pred_check
      _
    $region15: #{tpu_custom_call.1} parent=1 // pred_check_branch
      %22 = sbr.rel (0) target = $region17
    $region16: #{tpu_custom_call.1} parent=1 // pred_region
      _
    $region17: #{tpu_custom_call.1} parent=1 // pred_fallthru
      _
    // Predicated region
    $region18: #{tpu_custom_call.1} parent=1 // pred_check
      _
    $region19: #{tpu_custom_call.1} parent=1 // pred_check_branch
      %24 = sbr.rel (0) target = $region21
    $region20: #{tpu_custom_call.1} parent=1 // pred_region
      _
    $region21: #{tpu_custom_call.1} parent=1 // pred_fallthru
      _
    // Predicated region
    $region22: #{tpu_custom_call.1} parent=1 // pred_check
      _
    $region23: #{tpu_custom_call.1} parent=1 // pred_check_branch
      %26 = sbr.rel (0) target = $region25
    $region24: #{tpu_custom_call.1} parent=1 // pred_region
      _
    $region25: #{tpu_custom_call.1} parent=1 // pred_fallthru
      _
    // Predicated region
    $region26: #{tpu_custom_call.1} parent=1 // pred_check
      _
    $region27: #{tpu_custom_call.1} parent=1 // pred_check_branch
      %28 = sbr.rel (0) target = $region29
    $region28: #{tpu_custom_call.1} parent=1 // pred_region
      _
    $region29: #{tpu_custom_call.1} parent=1 // pred_fallthru
      _
    // Predicated region
    $region30: #{tpu_custom_call.1} parent=1 // pred_check
      _
    $region31: #{tpu_custom_call.1} parent=1 // pred_check_branch
      %30 = sbr.rel (0) target = $region33
    $region32: #{tpu_custom_call.1} parent=1 // pred_region
      _
    $region33: #{tpu_custom_call.1} parent=1 // pred_fallthru
      _
    %p32 = scmp.eq.s32.totalorder 0, 0
    // Predicated region
    $region34: #{tpu_custom_call.1} parent=1 // pred_check
      %p33 = pneg %p32
    $region35: #{tpu_custom_call.1} parent=1 // pred_check_branch
      %35 = sbr.rel (%p33) target = $region37
    $region36: #{tpu_custom_call.1} parent=1 // pred_region
      %vm36 = vcmask 0
      %37 = vst.msk [vmem:[#allocation2] sm:$0x1] %vm36, 0.0
    $region37: #{tpu_custom_call.1} parent=1 // pred_fallthru
      _
    %v38 = vld [vmem:[%s0] sm:$0xff]
    %v39 = vld [vmem:[%s0 + $0x8] sm:$0xff]
    %v40 = vld [vmem:[%s0 + $0x10] sm:$0xff]
    %v41 = vld [vmem:[%s0 + $0x18] sm:$0xff]
    %v42 = vld [vmem:[%s0 + $0x20] sm:$0xff]
    %v43 = vld [vmem:[%s0 + $0x28] sm:$0xff]
    %v44 = vld [vmem:[%s0 + $0x30] sm:$0xff]
    %v45 = vld [vmem:[%s0 + $0x38] sm:$0xff]
    %v46 = vld [vmem:[%s0 + $0x40] sm:$0xff]
    %v47 = vld [vmem:[%s0 + $0x48] sm:$0xff]
    %v48 = vld [vmem:[%s0 + $0x50] sm:$0xff]
    %v49 = vld [vmem:[%s0 + $0x58] sm:$0xff]
    %v50 = vld [vmem:[%s0 + $0x60] sm:$0xff]
    %v51 = vld [vmem:[%s0 + $0x68] sm:$0xff]
    %v52 = vld [vmem:[%s0 + $0x70] sm:$0xff]
    %v53 = vld [vmem:[%s0 + $0x78] sm:$0xff]
    %v54 = vld [vmem:[%s1] sm:$0xf]
    %v55 = vld [vmem:[%s1 + $0x4] sm:$0xf]
    %v56 = vld [vmem:[%s1 + $0x8] sm:$0xf]
    %v57 = vld [vmem:[%s1 + $0xc] sm:$0xf]
    %v58 = vld [vmem:[%s1 + $0x10] sm:$0xf]
    %v59 = vld [vmem:[%s1 + $0x14] sm:$0xf]
    %v60 = vld [vmem:[%s1 + $0x18] sm:$0xf]
    %v61 = vld [vmem:[%s1 + $0x1c] sm:$0xf]
    %v62 = vld [vmem:[%s1 + $0x20] sm:$0xf]
    %v63 = vld [vmem:[%s1 + $0x24] sm:$0xf]
    %v64 = vld [vmem:[%s1 + $0x28] sm:$0xf]
    %v65 = vld [vmem:[%s1 + $0x2c] sm:$0xf]
    %v66 = vld [vmem:[%s1 + $0x30] sm:$0xf]
    %v67 = vld [vmem:[%s1 + $0x34] sm:$0xf]
    %v68 = vld [vmem:[%s1 + $0x38] sm:$0xf]
    %v69 = vld [vmem:[%s1 + $0x3c] sm:$0xf]
    %v70 = vld [vmem:[%s1 + $0x40] sm:$0xf]
    %v71 = vld [vmem:[%s1 + $0x44] sm:$0xf]
    %v72 = vld [vmem:[%s1 + $0x48] sm:$0xf]
    %v73 = vld [vmem:[%s1 + $0x4c] sm:$0xf]
    %v74 = vld [vmem:[%s1 + $0x50] sm:$0xf]
    %v75 = vld [vmem:[%s1 + $0x54] sm:$0xf]
    %v76 = vld [vmem:[%s1 + $0x58] sm:$0xf]
    %v77 = vld [vmem:[%s1 + $0x5c] sm:$0xf]
    %v78 = vld [vmem:[%s1 + $0x60] sm:$0xf]
    %v79 = vld [vmem:[%s1 + $0x64] sm:$0xf]
    %v80 = vld [vmem:[%s1 + $0x68] sm:$0xf]
    %v81 = vld [vmem:[%s1 + $0x6c] sm:$0xf]
    %v82 = vld [vmem:[%s1 + $0x70] sm:$0xf]
    %v83 = vld [vmem:[%s1 + $0x74] sm:$0xf]
    %v84 = vld [vmem:[%s1 + $0x78] sm:$0xf]
    %v85 = vld [vmem:[%s1 + $0x7c] sm:$0xf]
    %v86 = vld [vmem:[%s2] sm:$0x1]
    %v88 = vlaneseq
    %v89 = vshrl.u32 %v88, 7
    %v90 = vsub.s32 0, %v89
    %v91 = vrot.slane %v86, %v90
    %v109 = vunpack.c.l.b16 %v38
    %v110 = vunpack.c.h.b16 %v38
    %v111 = vunpack.c.l.b16 %v39
    %v112 = vunpack.c.h.b16 %v39
    %v113 = vunpack.c.l.b16 %v40
    %v114 = vunpack.c.h.b16 %v40
    %v115 = vunpack.c.l.b16 %v41
    %v116 = vunpack.c.h.b16 %v41
    %v117 = vunpack.c.l.b16 %v42
    %v118 = vunpack.c.h.b16 %v42
    %v119 = vunpack.c.l.b16 %v43
    %v120 = vunpack.c.h.b16 %v43
    %v121 = vunpack.c.l.b16 %v44
    %v122 = vunpack.c.h.b16 %v44
    %v123 = vunpack.c.l.b16 %v45
    %v124 = vunpack.c.h.b16 %v45
    %v125 = vunpack.c.l.b16 %v46
    %v126 = vunpack.c.h.b16 %v46
    %v127 = vunpack.c.l.b16 %v47
    %v128 = vunpack.c.h.b16 %v47
    %v129 = vunpack.c.l.b16 %v48
    %v130 = vunpack.c.h.b16 %v48
    %v131 = vunpack.c.l.b16 %v49
    %v132 = vunpack.c.h.b16 %v49
    %v133 = vunpack.c.l.b16 %v50
    %v134 = vunpack.c.h.b16 %v50
    %v135 = vunpack.c.l.b16 %v51
    %v136 = vunpack.c.h.b16 %v51
    %v137 = vunpack.c.l.b16 %v52
    %v138 = vunpack.c.h.b16 %v52
    %v139 = vunpack.c.l.b16 %v53
    %v140 = vunpack.c.h.b16 %v53
    %v141 = vpack.c.b16 %v111, %v109
    %v142 = vpack.c.b16 %v112, %v110
    %v143 = vpack.c.b16 %v115, %v113
    %v144 = vpack.c.b16 %v116, %v114
    %v145 = vpack.c.b16 %v119, %v117
    %v146 = vpack.c.b16 %v120, %v118
    %v147 = vpack.c.b16 %v123, %v121
    %v148 = vpack.c.b16 %v124, %v122
    %v149 = vpack.c.b16 %v127, %v125
    %v150 = vpack.c.b16 %v128, %v126
    %v151 = vpack.c.b16 %v131, %v129
    %v152 = vpack.c.b16 %v132, %v130
    %v153 = vpack.c.b16 %v135, %v133
    %v154 = vpack.c.b16 %v136, %v134
    %v155 = vpack.c.b16 %v139, %v137
    %v156 = vpack.c.b16 %v140, %v138
    %v205 = vunpack.c.l.b16 %v54
    %v206 = vunpack.c.l.b16 %v55
    %v207 = vunpack.c.l.b16 %v56
    %v208 = vunpack.c.l.b16 %v57
    %v209 = vunpack.c.l.b16 %v58
    %v210 = vunpack.c.l.b16 %v59
    %v211 = vunpack.c.l.b16 %v60
    %v212 = vunpack.c.l.b16 %v61
    %v213 = vunpack.c.l.b16 %v62
    %v214 = vunpack.c.l.b16 %v63
    %v215 = vunpack.c.l.b16 %v64
    %v216 = vunpack.c.l.b16 %v65
    %v217 = vunpack.c.l.b16 %v66
    %v218 = vunpack.c.l.b16 %v67
    %v219 = vunpack.c.l.b16 %v68
    %v220 = vunpack.c.l.b16 %v69
    %v221 = vunpack.c.l.b16 %v70
    %v222 = vunpack.c.l.b16 %v71
    %v223 = vunpack.c.l.b16 %v72
    %v224 = vunpack.c.l.b16 %v73
    %v225 = vunpack.c.l.b16 %v74
    %v226 = vunpack.c.l.b16 %v75
    %v227 = vunpack.c.l.b16 %v76
    %v228 = vunpack.c.l.b16 %v77
    %v229 = vunpack.c.l.b16 %v78
    %v230 = vunpack.c.l.b16 %v79
    %v231 = vunpack.c.l.b16 %v80
    %v232 = vunpack.c.l.b16 %v81
    %v233 = vunpack.c.l.b16 %v82
    %v234 = vunpack.c.l.b16 %v83
    %v235 = vunpack.c.l.b16 %v84
    %v236 = vunpack.c.l.b16 %v85
    %v237 = vpack.c.b16 %v206, %v205
    %v238 = vpack.c.b16 %v208, %v207
    %v239 = vpack.c.b16 %v210, %v209
    %v240 = vpack.c.b16 %v212, %v211
    %v241 = vpack.c.b16 %v214, %v213
    %v242 = vpack.c.b16 %v216, %v215
    %v243 = vpack.c.b16 %v218, %v217
    %v244 = vpack.c.b16 %v220, %v219
    %v245 = vpack.c.b16 %v222, %v221
    %v246 = vpack.c.b16 %v224, %v223
    %v247 = vpack.c.b16 %v226, %v225
    %v248 = vpack.c.b16 %v228, %v227
    %v249 = vpack.c.b16 %v230, %v229
    %v250 = vpack.c.b16 %v232, %v231
    %v251 = vpack.c.b16 %v234, %v233
    %v252 = vpack.c.b16 %v236, %v235
    %269 = vmatprep.subr.bf16.mxu0 0
    %270 = vmatpush1.bf16.msra.mxu0 %v244
    %271 = vmatprep.subr.bf16.mxu0 0
    %272 = vmatpush1.bf16.msra.mxu0 %v243
    %273 = vmatprep.subr.bf16.mxu0 0
    %274 = vmatpush1.bf16.msra.mxu0 %v242
    %275 = vmatprep.subr.bf16.mxu0 0
    %276 = vmatpush1.bf16.msra.mxu0 %v241
    %277 = vmatprep.subr.bf16.mxu0 0
    %278 = vmatpush1.bf16.msra.mxu0 %v240
    %279 = vmatprep.subr.bf16.mxu0 0
    %280 = vmatpush1.bf16.msra.mxu0 %v239
    %281 = vmatprep.subr.bf16.mxu0 0
    %282 = vmatpush1.bf16.msra.mxu0 %v238
    %283 = vmatprep.subr.bf16.mxu0 0
    %284 = vmatpush1.bf16.msra.mxu0 %v237
    %285 = vmatprep.subr.bf16.mxu0 0
    %286 = vmatpush2.bf16.msra.mxu0 %v252
    %287 = vmatprep.subr.bf16.mxu0 0
    %288 = vmatpush2.bf16.msra.mxu0 %v251
    %289 = vmatprep.subr.bf16.mxu0 0
    %290 = vmatpush2.bf16.msra.mxu0 %v250
    %291 = vmatprep.subr.bf16.mxu0 0
    %292 = vmatpush2.bf16.msra.mxu0 %v249
    %293 = vmatprep.subr.bf16.mxu0 0
    %294 = vmatpush2.bf16.msra.mxu0 %v248
    %295 = vmatprep.subr.bf16.mxu0 0
    %296 = vmatpush2.bf16.msra.mxu0 %v247
    %297 = vmatprep.subr.bf16.mxu0 0
    %298 = vmatpush2.bf16.msra.mxu0 %v246
    %299 = vmatprep.subr.bf16.mxu0 0
    %300 = vmatpush2.bf16.msra.mxu0 %v245
    %301 = vmatprep.mubr.bf16.mxu0 %v142
    %302 = vmatmul.mubr.bf16.gmra.mxu0 %v141
    %v303 = vpop.f32.mrf.mxu0
    %v304 = vadd.f32 %v91, %v303
    %v305 = vpop.f32.mrf.mxu0
    %v306 = vpop.f32.mrf.mxu0
    %v307 = vadd.f32 %v91, %v306
    %v308 = vpop.f32.mrf.mxu0
    %309 = vmatprep.mubr.bf16.mxu0 %v144
    %310 = vmatmul.mubr.bf16.gmra.mxu0 %v143
    %v311 = vpop.f32.mrf.mxu0
    %v312 = vadd.f32 %v91, %v311
    %v313 = vpop.f32.mrf.mxu0
    %v314 = vpop.f32.mrf.mxu0
    %v315 = vadd.f32 %v91, %v314
    %v316 = vpop.f32.mrf.mxu0
    %317 = vmatprep.mubr.bf16.mxu0 %v146
    %318 = vmatmul.mubr.bf16.gmra.mxu0 %v145
    %v319 = vpop.f32.mrf.mxu0
    %v320 = vadd.f32 %v91, %v319
    %v321 = vpop.f32.mrf.mxu0
    %v322 = vpop.f32.mrf.mxu0
    %v323 = vadd.f32 %v91, %v322
    %v324 = vpop.f32.mrf.mxu0
    %325 = vmatprep.mubr.bf16.mxu0 %v148
    %326 = vmatmul.mubr.bf16.gmra.mxu0 %v147
    %v327 = vpop.f32.mrf.mxu0
    %v328 = vadd.f32 %v91, %v327
    %v329 = vpop.f32.mrf.mxu0
    %v330 = vpop.f32.mrf.mxu0
    %v331 = vadd.f32 %v91, %v330
    %v332 = vpop.f32.mrf.mxu0
    %333 = vmatprep.mubr.bf16.mxu0 %v150
    %334 = vmatmul.mubr.bf16.gmra.mxu0 %v149
    %v335 = vpop.f32.mrf.mxu0
    %v336 = vadd.f32 %v91, %v335
    %v337 = vpop.f32.mrf.mxu0
    %v338 = vpop.f32.mrf.mxu0
    %v339 = vadd.f32 %v91, %v338
    %v340 = vpop.f32.mrf.mxu0
    %341 = vmatprep.mubr.bf16.mxu0 %v152
    %342 = vmatmul.mubr.bf16.gmra.mxu0 %v151
    %v343 = vpop.f32.mrf.mxu0
    %v344 = vadd.f32 %v91, %v343
    %v345 = vpop.f32.mrf.mxu0
    %v346 = vpop.f32.mrf.mxu0
    %v347 = vadd.f32 %v91, %v346
    %v348 = vpop.f32.mrf.mxu0
    %349 = vmatprep.mubr.bf16.mxu0 %v154
    %350 = vmatmul.mubr.bf16.gmra.mxu0 %v153
    %v351 = vpop.f32.mrf.mxu0
    %v352 = vadd.f32 %v91, %v351
    %v353 = vpop.f32.mrf.mxu0
    %v354 = vpop.f32.mrf.mxu0
    %v355 = vadd.f32 %v91, %v354
    %v356 = vpop.f32.mrf.mxu0
    %357 = vmatprep.mubr.bf16.mxu0 %v156
    %358 = vmatmul.mubr.bf16.gmra.mxu0 %v155
    %v359 = vpop.f32.mrf.mxu0
    %v360 = vadd.f32 %v91, %v359
    %v361 = vpop.f32.mrf.mxu0
    %v362 = vpop.f32.mrf.mxu0
    %v363 = vadd.f32 %v91, %v362
    %v364 = vpop.f32.mrf.mxu0
    %365 = vdwg.mxu0
    %v366 = vmax.f32 %v304, 0.0
    %v367 = vmax.f32 %v307, 0.0
    %v368 = vmax.f32 %v312, 0.0
    %v369 = vmax.f32 %v315, 0.0
    %v370 = vmax.f32 %v320, 0.0
    %v371 = vmax.f32 %v323, 0.0
    %v372 = vmax.f32 %v328, 0.0
    %v373 = vmax.f32 %v331, 0.0
    %v374 = vmax.f32 %v336, 0.0
    %v375 = vmax.f32 %v339, 0.0
    %v376 = vmax.f32 %v344, 0.0
    %v377 = vmax.f32 %v347, 0.0
    %v378 = vmax.f32 %v352, 0.0
    %v379 = vmax.f32 %v355, 0.0
    %v380 = vmax.f32 %v360, 0.0
    %v381 = vmax.f32 %v363, 0.0
    %v382 = vld [vmem:[%s3] sm:$0x1]
    %v384 = vlaneseq
    %v385 = vshrl.u32 %v384, 7
    %v386 = vsub.s32 0, %v385
    %v387 = vrot.slane %v382, %v386
    %v389 = vmul.f32 %v366, %v387
    %v390 = vmul.f32 %v367, %v387
    %v391 = vmul.f32 %v368, %v387
    %v392 = vmul.f32 %v369, %v387
    %v393 = vmul.f32 %v370, %v387
    %v394 = vmul.f32 %v371, %v387
    %v395 = vmul.f32 %v372, %v387
    %v396 = vmul.f32 %v373, %v387
    %v397 = vmul.f32 %v374, %v387
    %v398 = vmul.f32 %v375, %v387
    %v399 = vmul.f32 %v376, %v387
    %v400 = vmul.f32 %v377, %v387
    %v401 = vmul.f32 %v378, %v387
    %v402 = vmul.f32 %v379, %v387
    %v403 = vmul.f32 %v380, %v387
    %v404 = vmul.f32 %v381, %v387
    %405 = vadd.xlane.f32.xlu0 %v389
    %v406 = vpop.xlane.xlu0 %405
    %407 = vadd.xlane.f32.xlu0 %v390
    %v408 = vpop.xlane.xlu0 %407
    %409 = vadd.xlane.f32.xlu0 %v391
    %v410 = vpop.xlane.xlu0 %409
    %411 = vadd.xlane.f32.xlu0 %v392
    %v412 = vpop.xlane.xlu0 %411
    %413 = vadd.xlane.f32.xlu0 %v393
    %v414 = vpop.xlane.xlu0 %413
    %415 = vadd.xlane.f32.xlu0 %v394
    %v416 = vpop.xlane.xlu0 %415
    %417 = vadd.xlane.f32.xlu0 %v395
    %v418 = vpop.xlane.xlu0 %417
    %419 = vadd.xlane.f32.xlu0 %v396
    %v420 = vpop.xlane.xlu0 %419
    %421 = vadd.xlane.f32.xlu0 %v397
    %v422 = vpop.xlane.xlu0 %421
    %423 = vadd.xlane.f32.xlu0 %v398
    %v424 = vpop.xlane.xlu0 %423
    %425 = vadd.xlane.f32.xlu0 %v399
    %v426 = vpop.xlane.xlu0 %425
    %427 = vadd.xlane.f32.xlu0 %v400
    %v428 = vpop.xlane.xlu0 %427
    %429 = vadd.xlane.f32.xlu0 %v401
    %v430 = vpop.xlane.xlu0 %429
    %431 = vadd.xlane.f32.xlu0 %v402
    %v432 = vpop.xlane.xlu0 %431
    %433 = vadd.xlane.f32.xlu0 %v403
    %v434 = vpop.xlane.xlu0 %433
    %435 = vadd.xlane.f32.xlu0 %v404
    %v436 = vpop.xlane.xlu0 %435
    %s437 = sld [smem:[#allocation3]]
    %v438 = vstv %s437
    %v439 = vadd.f32 %v406, %v438
    %v440 = vadd.f32 %v408, %v438
    %v441 = vadd.f32 %v410, %v438
    %v442 = vadd.f32 %v412, %v438
    %v443 = vadd.f32 %v414, %v438
    %v444 = vadd.f32 %v416, %v438
    %v445 = vadd.f32 %v418, %v438
    %v446 = vadd.f32 %v420, %v438
    %v447 = vadd.f32 %v422, %v438
    %v448 = vadd.f32 %v424, %v438
    %v449 = vadd.f32 %v426, %v438
    %v450 = vadd.f32 %v428, %v438
    %v451 = vadd.f32 %v430, %v438
    %v452 = vadd.f32 %v432, %v438
    %v453 = vadd.f32 %v434, %v438
    %v454 = vadd.f32 %v436, %v438
    %v455 = vld [vmem:[%s5] sm:$0xff]
    %v456 = vld [vmem:[%s5 + $0x8] sm:$0xff]
    %v457 = vld [vmem:[%s5 + $0x10] sm:$0xff]
    %v458 = vld [vmem:[%s5 + $0x18] sm:$0xff]
    %v459 = vld [vmem:[%s5 + $0x20] sm:$0xff]
    %v460 = vld [vmem:[%s5 + $0x28] sm:$0xff]
    %v461 = vld [vmem:[%s5 + $0x30] sm:$0xff]
    %v462 = vld [vmem:[%s5 + $0x38] sm:$0xff]
    %v463 = vld [vmem:[%s5 + $0x40] sm:$0xff]
    %v464 = vld [vmem:[%s5 + $0x48] sm:$0xff]
    %v465 = vld [vmem:[%s5 + $0x50] sm:$0xff]
    %v466 = vld [vmem:[%s5 + $0x58] sm:$0xff]
    %v467 = vld [vmem:[%s5 + $0x60] sm:$0xff]
    %v468 = vld [vmem:[%s5 + $0x68] sm:$0xff]
    %v469 = vld [vmem:[%s5 + $0x70] sm:$0xff]
    %v470 = vld [vmem:[%s5 + $0x78] sm:$0xff]
    %v471 = vmul.u32 %v455, 2
    %v472 = vmul.u32 %v456, 2
    %v473 = vmul.u32 %v457, 2
    %v474 = vmul.u32 %v458, 2
    %v475 = vmul.u32 %v459, 2
    %v476 = vmul.u32 %v460, 2
    %v477 = vmul.u32 %v461, 2
    %v478 = vmul.u32 %v462, 2
    %v479 = vmul.u32 %v463, 2
    %v480 = vmul.u32 %v464, 2
    %v481 = vmul.u32 %v465, 2
    %v482 = vmul.u32 %v466, 2
    %v483 = vmul.u32 %v467, 2
    %v484 = vmul.u32 %v468, 2
    %v485 = vmul.u32 %v469, 2
    %v486 = vmul.u32 %v470, 2
    %v487 = vsub.s32 %v471, 1
    %v488 = vsub.s32 %v472, 1
    %v489 = vsub.s32 %v473, 1
    %v490 = vsub.s32 %v474, 1
    %v491 = vsub.s32 %v475, 1
    %v492 = vsub.s32 %v476, 1
    %v493 = vsub.s32 %v477, 1
    %v494 = vsub.s32 %v478, 1
    %v495 = vsub.s32 %v479, 1
    %v496 = vsub.s32 %v480, 1
    %v497 = vsub.s32 %v481, 1
    %v498 = vsub.s32 %v482, 1
    %v499 = vsub.s32 %v483, 1
    %v500 = vsub.s32 %v484, 1
    %v501 = vsub.s32 %v485, 1
    %v502 = vsub.s32 %v486, 1
    %v503 = vcvt.s32.f32 %v487
    %v504 = vcvt.s32.f32 %v488
    %v505 = vcvt.s32.f32 %v489
    %v506 = vcvt.s32.f32 %v490
    %v507 = vcvt.s32.f32 %v491
    %v508 = vcvt.s32.f32 %v492
    %v509 = vcvt.s32.f32 %v493
    %v510 = vcvt.s32.f32 %v494
    %v511 = vcvt.s32.f32 %v495
    %v512 = vcvt.s32.f32 %v496
    %v513 = vcvt.s32.f32 %v497
    %v514 = vcvt.s32.f32 %v498
    %v515 = vcvt.s32.f32 %v499
    %v516 = vcvt.s32.f32 %v500
    %v517 = vcvt.s32.f32 %v501
    %v518 = vcvt.s32.f32 %v502
    %v519 = vmul.f32 %v503, %v439
    %v520 = vmul.f32 %v504, %v440
    %v521 = vmul.f32 %v505, %v441
    %v522 = vmul.f32 %v506, %v442
    %v523 = vmul.f32 %v507, %v443
    %v524 = vmul.f32 %v508, %v444
    %v525 = vmul.f32 %v509, %v445
    %v526 = vmul.f32 %v510, %v446
    %v527 = vmul.f32 %v511, %v447
    %v528 = vmul.f32 %v512, %v448
    %v529 = vmul.f32 %v513, %v449
    %v530 = vmul.f32 %v514, %v450
    %v531 = vmul.f32 %v515, %v451
    %v532 = vmul.f32 %v516, %v452
    %v533 = vmul.f32 %v517, %v453
    %v534 = vmul.f32 %v518, %v454
    %v535 = vsub.f32 0.0, %v519
    %v536 = vsub.f32 0.0, %v520
    %v537 = vsub.f32 0.0, %v521
    %v538 = vsub.f32 0.0, %v522
    %v539 = vsub.f32 0.0, %v523
    %v540 = vsub.f32 0.0, %v524
    %v541 = vsub.f32 0.0, %v525
    %v542 = vsub.f32 0.0, %v526
    %v543 = vsub.f32 0.0, %v527
    %v544 = vsub.f32 0.0, %v528
    %v545 = vsub.f32 0.0, %v529
    %v546 = vsub.f32 0.0, %v530
    %v547 = vsub.f32 0.0, %v531
    %v548 = vsub.f32 0.0, %v532
    %v549 = vsub.f32 0.0, %v533
    %v550 = vsub.f32 0.0, %v534
    %v551 = vmul.f32 %v535, 1.442695
    %v552 = vpow.pop %v551
    %v553 = vmul.f32 %v536, 1.442695
    %v554 = vpow.pop %v553
    %v555 = vmul.f32 %v537, 1.442695
    %v556 = vpow.pop %v555
    %v557 = vmul.f32 %v538, 1.442695
    %v558 = vpow.pop %v557
    %v559 = vmul.f32 %v539, 1.442695
    %v560 = vpow.pop %v559
    %v561 = vmul.f32 %v540, 1.442695
    %v562 = vpow.pop %v561
    %v563 = vmul.f32 %v541, 1.442695
    %v564 = vpow.pop %v563
    %v565 = vmul.f32 %v542, 1.442695
    %v566 = vpow.pop %v565
    %v567 = vmul.f32 %v543, 1.442695
    %v568 = vpow.pop %v567
    %v569 = vmul.f32 %v544, 1.442695
    %v570 = vpow.pop %v569
    %v571 = vmul.f32 %v545, 1.442695
    %v572 = vpow.pop %v571
    %v573 = vmul.f32 %v546, 1.442695
    %v574 = vpow.pop %v573
    %v575 = vmul.f32 %v547, 1.442695
    %v576 = vpow.pop %v575
    %v577 = vmul.f32 %v548, 1.442695
    %v578 = vpow.pop %v577
    %v579 = vmul.f32 %v549, 1.442695
    %v580 = vpow.pop %v579
    %v581 = vmul.f32 %v550, 1.442695
    %v582 = vpow.pop %v581
    %v583 = vadd.f32 %v552, 1.0
    %v584 = vadd.f32 %v554, 1.0
    %v585 = vadd.f32 %v556, 1.0
    %v586 = vadd.f32 %v558, 1.0
    %v587 = vadd.f32 %v560, 1.0
    %v588 = vadd.f32 %v562, 1.0
    %v589 = vadd.f32 %v564, 1.0
    %v590 = vadd.f32 %v566, 1.0
    %v591 = vadd.f32 %v568, 1.0
    %v592 = vadd.f32 %v570, 1.0
    %v593 = vadd.f32 %v572, 1.0
    %v594 = vadd.f32 %v574, 1.0
    %v595 = vadd.f32 %v576, 1.0
    %v596 = vadd.f32 %v578, 1.0
    %v597 = vadd.f32 %v580, 1.0
    %v598 = vadd.f32 %v582, 1.0
    %v599 = vrcp.pop %v583
    %v600 = vmul.f32 1.0, %v599
    %v601 = vrcp.pop %v584
    %v602 = vmul.f32 1.0, %v601
    %v603 = vrcp.pop %v585
    %v604 = vmul.f32 1.0, %v603
    %v605 = vrcp.pop %v586
    %v606 = vmul.f32 1.0, %v605
    %v607 = vrcp.pop %v587
    %v608 = vmul.f32 1.0, %v607
    %v609 = vrcp.pop %v588
    %v610 = vmul.f32 1.0, %v609
    %v611 = vrcp.pop %v589
    %v612 = vmul.f32 1.0, %v611
    %v613 = vrcp.pop %v590
    %v614 = vmul.f32 1.0, %v613
    %v615 = vrcp.pop %v591
    %v616 = vmul.f32 1.0, %v615
    %v617 = vrcp.pop %v592
    %v618 = vmul.f32 1.0, %v617
    %v619 = vrcp.pop %v593
    %v620 = vmul.f32 1.0, %v619
    %v621 = vrcp.pop %v594
    %v622 = vmul.f32 1.0, %v621
    %v623 = vrcp.pop %v595
    %v624 = vmul.f32 1.0, %v623
    %v625 = vrcp.pop %v596
    %v626 = vmul.f32 1.0, %v625
    %v627 = vrcp.pop %v597
    %v628 = vmul.f32 1.0, %v627
    %v629 = vrcp.pop %v598
    %v630 = vmul.f32 1.0, %v629
    %v631 = vld [vmem:[%s6] sm:$0xff]
    %v632 = vld [vmem:[%s6 + $0x8] sm:$0xff]
    %v633 = vld [vmem:[%s6 + $0x10] sm:$0xff]
    %v634 = vld [vmem:[%s6 + $0x18] sm:$0xff]
    %v635 = vld [vmem:[%s6 + $0x20] sm:$0xff]
    %v636 = vld [vmem:[%s6 + $0x28] sm:$0xff]
    %v637 = vld [vmem:[%s6 + $0x30] sm:$0xff]
    %v638 = vld [vmem:[%s6 + $0x38] sm:$0xff]
    %v639 = vld [vmem:[%s6 + $0x40] sm:$0xff]
    %v640 = vld [vmem:[%s6 + $0x48] sm:$0xff]
    %v641 = vld [vmem:[%s6 + $0x50] sm:$0xff]
    %v642 = vld [vmem:[%s6 + $0x58] sm:$0xff]
    %v643 = vld [vmem:[%s6 + $0x60] sm:$0xff]
    %v644 = vld [vmem:[%s6 + $0x68] sm:$0xff]
    %v645 = vld [vmem:[%s6 + $0x70] sm:$0xff]
    %v646 = vld [vmem:[%s6 + $0x78] sm:$0xff]
    %v647 = vrcp.pop %v631
    %v648 = vmul.f32 %v600, %v647
    %v649 = vrcp.pop %v632
    %v650 = vmul.f32 %v602, %v649
    %v651 = vrcp.pop %v633
    %v652 = vmul.f32 %v604, %v651
    %v653 = vrcp.pop %v634
    %v654 = vmul.f32 %v606, %v653
    %v655 = vrcp.pop %v635
    %v656 = vmul.f32 %v608, %v655
    %v657 = vrcp.pop %v636
    %v658 = vmul.f32 %v610, %v657
    %v659 = vrcp.pop %v637
    %v660 = vmul.f32 %v612, %v659
    %v661 = vrcp.pop %v638
    %v662 = vmul.f32 %v614, %v661
    %v663 = vrcp.pop %v639
    %v664 = vmul.f32 %v616, %v663
    %v665 = vrcp.pop %v640
    %v666 = vmul.f32 %v618, %v665
    %v667 = vrcp.pop %v641
    %v668 = vmul.f32 %v620, %v667
    %v669 = vrcp.pop %v642
    %v670 = vmul.f32 %v622, %v669
    %v671 = vrcp.pop %v643
    %v672 = vmul.f32 %v624, %v671
    %v673 = vrcp.pop %v644
    %v674 = vmul.f32 %v626, %v673
    %v675 = vrcp.pop %v645
    %v676 = vmul.f32 %v628, %v675
    %v677 = vrcp.pop %v646
    %v678 = vmul.f32 %v630, %v677
    %v679 = vld [vmem:[%s7] sm:$0xff]
    %v680 = vld [vmem:[%s7 + $0x8] sm:$0xff]
    %v681 = vld [vmem:[%s7 + $0x10] sm:$0xff]
    %v682 = vld [vmem:[%s7 + $0x18] sm:$0xff]
    %v683 = vld [vmem:[%s7 + $0x20] sm:$0xff]
    %v684 = vld [vmem:[%s7 + $0x28] sm:$0xff]
    %v685 = vld [vmem:[%s7 + $0x30] sm:$0xff]
    %v686 = vld [vmem:[%s7 + $0x38] sm:$0xff]
    %v687 = vld [vmem:[%s7 + $0x40] sm:$0xff]
    %v688 = vld [vmem:[%s7 + $0x48] sm:$0xff]
    %v689 = vld [vmem:[%s7 + $0x50] sm:$0xff]
    %v690 = vld [vmem:[%s7 + $0x58] sm:$0xff]
    %v691 = vld [vmem:[%s7 + $0x60] sm:$0xff]
    %v692 = vld [vmem:[%s7 + $0x68] sm:$0xff]
    %v693 = vld [vmem:[%s7 + $0x70] sm:$0xff]
    %v694 = vld [vmem:[%s7 + $0x78] sm:$0xff]
    %v695 = vmul.f32 %v648, %v679
    %v696 = vmul.f32 %v650, %v680
    %v697 = vmul.f32 %v652, %v681
    %v698 = vmul.f32 %v654, %v682
    %v699 = vmul.f32 %v656, %v683
    %v700 = vmul.f32 %v658, %v684
    %v701 = vmul.f32 %v660, %v685
    %v702 = vmul.f32 %v662, %v686
    %v703 = vmul.f32 %v664, %v687
    %v704 = vmul.f32 %v666, %v688
    %v705 = vmul.f32 %v668, %v689
    %v706 = vmul.f32 %v670, %v690
    %v707 = vmul.f32 %v672, %v691
    %v708 = vmul.f32 %v674, %v692
    %v709 = vmul.f32 %v676, %v693
    %v710 = vmul.f32 %v678, %v694
    %v711 = vmax.f32 %v648, 0.8
    %v712 = vmax.f32 %v650, 0.8
    %v713 = vmax.f32 %v652, 0.8
    %v714 = vmax.f32 %v654, 0.8
    %v715 = vmax.f32 %v656, 0.8
    %v716 = vmax.f32 %v658, 0.8
    %v717 = vmax.f32 %v660, 0.8
    %v718 = vmax.f32 %v662, 0.8
    %v719 = vmax.f32 %v664, 0.8
    %v720 = vmax.f32 %v666, 0.8
    %v721 = vmax.f32 %v668, 0.8
    %v722 = vmax.f32 %v670, 0.8
    %v723 = vmax.f32 %v672, 0.8
    %v724 = vmax.f32 %v674, 0.8
    %v725 = vmax.f32 %v676, 0.8
    %v726 = vmax.f32 %v678, 0.8
    %v727 = vmin.f32 %v711, 1.2
    %v728 = vmin.f32 %v712, 1.2
    %v729 = vmin.f32 %v713, 1.2
    %v730 = vmin.f32 %v714, 1.2
    %v731 = vmin.f32 %v715, 1.2
    %v732 = vmin.f32 %v716, 1.2
    %v733 = vmin.f32 %v717, 1.2
    %v734 = vmin.f32 %v718, 1.2
    %v735 = vmin.f32 %v719, 1.2
    %v736 = vmin.f32 %v720, 1.2
    %v737 = vmin.f32 %v721, 1.2
    %v738 = vmin.f32 %v722, 1.2
    %v739 = vmin.f32 %v723, 1.2
    %v740 = vmin.f32 %v724, 1.2
    %v741 = vmin.f32 %v725, 1.2
    %v742 = vmin.f32 %v726, 1.2
    %v743 = vmul.f32 %v727, %v679
    %v744 = vmul.f32 %v728, %v680
    %v745 = vmul.f32 %v729, %v681
    %v746 = vmul.f32 %v730, %v682
    %v747 = vmul.f32 %v731, %v683
    %v748 = vmul.f32 %v732, %v684
    %v749 = vmul.f32 %v733, %v685
    %v750 = vmul.f32 %v734, %v686
    %v751 = vmul.f32 %v735, %v687
    %v752 = vmul.f32 %v736, %v688
    %v753 = vmul.f32 %v737, %v689
    %v754 = vmul.f32 %v738, %v690
    %v755 = vmul.f32 %v739, %v691
    %v756 = vmul.f32 %v740, %v692
    %v757 = vmul.f32 %v741, %v693
    %v758 = vmul.f32 %v742, %v694
    %v759 = vmin.f32 %v695, %v743
    %v760 = vmin.f32 %v696, %v744
    %v761 = vmin.f32 %v697, %v745
    %v762 = vmin.f32 %v698, %v746
    %v763 = vmin.f32 %v699, %v747
    %v764 = vmin.f32 %v700, %v748
    %v765 = vmin.f32 %v701, %v749
    %v766 = vmin.f32 %v702, %v750
    %v767 = vmin.f32 %v703, %v751
    %v768 = vmin.f32 %v704, %v752
    %v769 = vmin.f32 %v705, %v753
    %v770 = vmin.f32 %v706, %v754
    %v771 = vmin.f32 %v707, %v755
    %v772 = vmin.f32 %v708, %v756
    %v773 = vmin.f32 %v709, %v757
    %v774 = vmin.f32 %v710, %v758
    %v775 = vsub.f32 0.0, %v759
    %v776 = vsub.f32 0.0, %v760
    %v777 = vsub.f32 0.0, %v761
    %v778 = vsub.f32 0.0, %v762
    %v779 = vsub.f32 0.0, %v763
    %v780 = vsub.f32 0.0, %v764
    %v781 = vsub.f32 0.0, %v765
    %v782 = vsub.f32 0.0, %v766
    %v783 = vsub.f32 0.0, %v767
    %v784 = vsub.f32 0.0, %v768
    %v785 = vsub.f32 0.0, %v769
    %v786 = vsub.f32 0.0, %v770
    %v787 = vsub.f32 0.0, %v771
    %v788 = vsub.f32 0.0, %v772
    %v789 = vsub.f32 0.0, %v773
    %v790 = vsub.f32 0.0, %v774
    %v791 = vld [vmem:[#allocation2] sm:$0x1]
    %vm792 = vcmask 7168
    %v793 = vsel %vm792, %v775, 0.0
    %v794 = vsel %vm792, %v776, 0.0
    %v795 = vadd.f32 %v793, %v794
    %v796 = vsel %vm792, %v777, 0.0
    %v797 = vadd.f32 %v795, %v796
    %v798 = vsel %vm792, %v778, 0.0
    %v799 = vadd.f32 %v797, %v798
    %v800 = vsel %vm792, %v779, 0.0
    %v801 = vadd.f32 %v799, %v800
    %v802 = vsel %vm792, %v780, 0.0
    %v803 = vadd.f32 %v801, %v802
    %v804 = vsel %vm792, %v781, 0.0
    %v805 = vadd.f32 %v803, %v804
    %v806 = vsel %vm792, %v782, 0.0
    %v807 = vadd.f32 %v805, %v806
    %v808 = vsel %vm792, %v783, 0.0
    %v809 = vadd.f32 %v807, %v808
    %v810 = vsel %vm792, %v784, 0.0
    %v811 = vadd.f32 %v809, %v810
    %v812 = vsel %vm792, %v785, 0.0
    %v813 = vadd.f32 %v811, %v812
    %v814 = vsel %vm792, %v786, 0.0
    %v815 = vadd.f32 %v813, %v814
    %v816 = vsel %vm792, %v787, 0.0
    %v817 = vadd.f32 %v815, %v816
    %v818 = vsel %vm792, %v788, 0.0
    %v819 = vadd.f32 %v817, %v818
    %v820 = vsel %vm792, %v789, 0.0
    %v821 = vadd.f32 %v819, %v820
    %v822 = vsel %vm792, %v790, 0.0
    %v823 = vadd.f32 %v821, %v822
    %v824 = vrot.slane %v823, 4
    %v825 = vadd.f32 %v823, %v824
    %v826 = vrot.slane %v825, 2
    %v827 = vadd.f32 %v825, %v826
    %v828 = vrot.slane %v827, 1
    %v829 = vadd.f32 %v827, %v828
    %v830 = vadd.f32 %v791, %v829
    %vm831 = vcmask 0
    %832 = vst.msk [vmem:[#allocation2] sm:$0x1] %vm831, %v830
    // Predicated region
    $region38: #{tpu_custom_call.1} parent=1 // pred_check
      %p833 = pneg %p32
    $region39: #{tpu_custom_call.1} parent=1 // pred_check_branch
      %835 = sbr.rel (%p833) target = $region41
    $region40: #{tpu_custom_call.1} parent=1 // pred_region
      %v836 = vld [vmem:[#allocation2] sm:$0x1]
      %838 = vset.pattern.permute.xlu0 0
      %839 = vperm.xlu0 %838, %v836
      %v840 = vpop.permute.xlu0 %839
      %v842 = vlaneseq
      %v843 = vshrl.u32 %v842, 7
      %v844 = vsub.s32 0, %v843
      %v845 = vrot.slane %v840, %v844
      %v846 = vmul.f32 %v845, 0.125
      %847 = vst [vmem:[#allocation4] sm:$0x1] %v846
    $region41: #{tpu_custom_call.1} parent=1 // pred_fallthru
      _
    // Predicated region
    $region42: #{tpu_custom_call.1} parent=1 // pred_check
      _
    $region43: #{tpu_custom_call.1} parent=1 // pred_check_branch
      %849 = sbr.rel (0) target = $region45
    $region44: #{tpu_custom_call.1} parent=1 // pred_region
      %s851 = ssub.s32 16, 16
      %852 = vsyncadd [#allocation5], %s851
      %s854 = sshll.u32 [#allocation4], 4
      %s855 = int_to_ptr.vmem [resolvable:$true] %s854
      %857 = dma.vmem_to_hbm [thread:$0]  %s855, 16, %s8, [#allocation5]
    $region45: #{tpu_custom_call.1} parent=1 // pred_fallthru
      _
    // Predicated region
    $region46: #{tpu_custom_call.1} parent=1 // pred_check
      _
    $region47: #{tpu_custom_call.1} parent=1 // pred_check_branch
      %859 = sbr.rel (0) target = $region49
    $region48: #{tpu_custom_call.1} parent=1 // pred_region
      %860 = dma.done [#allocation5], 16
    $region49: #{tpu_custom_call.1} parent=1 // pred_fallthru
      _
    %861 = vsyncpa [#allocation5], 1

</llo_original>
